<compile_context>
chip_gen: v7x
topology: tpu7x:2x2x1
jax: 0.10.0
libtpu: 0.0.40
codegen_flags: <defaults>
</compile_context>

<pallas_src>
import functools

import jax
import jax.numpy as jnp
from jax.experimental import pallas as pl
from jax.experimental.pallas import tpu as pltpu


def _round_up(a, m):
    return (a + m - 1) // m * m


def _tdnn_affine_kernel(x_ref, w_ref, b_ref, y_ref, ssum_ref, ssq_ref, u_ref,
                        *, context_size, dilation, tl, l_valid, d_pad):
    """One (batch, time-tile) step: unfold -> fused matmul -> bias -> ReLU -> partial BN sums.

    x_ref : (1, T_pad, D_pad) f32   full (padded) sequence of this batch element
    w_ref : (K_pad, O_pad)    bf16  unfold-ordered weight (zero rows/cols for padding)
    b_ref : (1, O_pad)        f32   bias
    y_ref : (1, TL, O_pad)    f32   pre-BN activations (output)
    ssum_ref / ssq_ref : (1, 1, 1, O_pad) f32  per-tile BN partial sums (outputs)
    u_ref : (TL, K_pad)       bf16  VMEM scratch holding the unfolded tile
    """
    lt = pl.program_id(1)
    t0 = pl.multiple_of(lt * tl, tl)

    # Assemble the unfolded tile with context_size lane-aligned copies of x.
    # (context_size is a small static constant, so a Python unroll is fine.)
    for c in range(context_size):
        xs = x_ref[0, pl.ds(t0 + c * dilation, tl), :]           # (TL, D_pad) f32
        u_ref[:, c * d_pad:(c + 1) * d_pad] = xs.astype(jnp.bfloat16)

    # Single fused MXU matmul: K = context*D_pad, bf16 operands, f32 accumulation.
    acc = jnp.dot(u_ref[...], w_ref[...], preferred_element_type=jnp.float32)
    yb = jnp.maximum(acc + b_ref[...], 0.0)                      # (TL, O_pad) f32
    y_ref[0] = yb

    # BatchNorm partial sums over the valid (unpadded) rows of this tile.
    rows = jax.lax.broadcasted_iota(jnp.int32, (tl, 1), 0)
    valid = jnp.minimum(tl, l_valid - lt * tl)
    ym = jnp.where(rows < valid, yb, 0.0)
    ssum_ref[0, 0] = jnp.sum(ym, axis=0, keepdims=True)
    ssq_ref[0, 0] = jnp.sum(ym * ym, axis=0, keepdims=True)


def _tdnn_bn_kernel(y_ref, scale_ref, shift_ref, o_ref):
    """Streaming BatchNorm affine: out = y * scale + shift (per channel)."""
    o_ref[0] = y_ref[0] * scale_ref[...] + shift_ref[...]


def tdnn_forward(x, w, b, gamma, beta, *, context_size, dilation, eps=1e-5,
                 time_tile=256):
    """x: (B, T, D) f32; w: (context*D, O) f32; b/gamma/beta: (1, O) f32."""
    B, T, D = x.shape
    O = w.shape[1]
    halo = dilation * (context_size - 1)
    L = T - halo

    # Padded / tiled geometry: lane-dense last dims, sublane-aligned time tiles.
    D_pad = _round_up(D, 128)
    O_pad = _round_up(O, 128)
    K_pad = context_size * D_pad
    TL = min(time_tile, _round_up(L, 8))
    nLT = pl.cdiv(L, TL)
    L_pad = nLT * TL
    T_pad = L_pad + halo

    # Wrapper-side repacking (zero padding keeps the math exact).
    x_p = jnp.zeros((B, T_pad, D_pad), jnp.float32).at[:, :T, :D].set(x)
    w_p = (jnp.zeros((context_size, D_pad, O_pad), jnp.float32)
           .at[:, :D, :O].set(w.reshape(context_size, D, O))
           .reshape(K_pad, O_pad).astype(jnp.bfloat16))
    b_p = jnp.zeros((1, O_pad), jnp.float32).at[:, :O].set(b.reshape(1, O))
    g_p = jnp.ones((O_pad,), jnp.float32).at[:O].set(gamma.reshape(-1))
    be_p = jnp.zeros((O_pad,), jnp.float32).at[:O].set(beta.reshape(-1))

    kernel1 = functools.partial(
        _tdnn_affine_kernel, context_size=context_size, dilation=dilation,
        tl=TL, l_valid=L, d_pad=D_pad)

    y, ssum, ssq = pl.pallas_call(
        kernel1,
        out_shape=(
            jax.ShapeDtypeStruct((B, L_pad, O_pad), jnp.float32),
            jax.ShapeDtypeStruct((B, nLT, 1, O_pad), jnp.float32),
            jax.ShapeDtypeStruct((B, nLT, 1, O_pad), jnp.float32),
        ),
        grid=(B, nLT),
        in_specs=[
            pl.BlockSpec((1, T_pad, D_pad), lambda bi, lt: (bi, 0, 0)),
            pl.BlockSpec((K_pad, O_pad), lambda bi, lt: (0, 0)),
            pl.BlockSpec((1, O_pad), lambda bi, lt: (0, 0)),
        ],
        out_specs=(
            pl.BlockSpec((1, TL, O_pad), lambda bi, lt: (bi, lt, 0)),
            pl.BlockSpec((1, 1, 1, O_pad), lambda bi, lt: (bi, lt, 0, 0)),
            pl.BlockSpec((1, 1, 1, O_pad), lambda bi, lt: (bi, lt, 0, 0)),
        ),
        scratch_shapes=[pltpu.VMEM((TL, K_pad), jnp.bfloat16)],
        compiler_params=pltpu.CompilerParams(
            dimension_semantics=("parallel", "parallel"),
            vmem_limit_bytes=48 * 1024 * 1024),   # < v7x 64 MiB physical
    )(x_p, w_p, b_p)

    # Reduce BN partial sums (tiny O-length vectors) and build fused scale/shift.
    n = float(B * L)
    s1 = jnp.sum(ssum, axis=(0, 1, 2))
    s2 = jnp.sum(ssq, axis=(0, 1, 2))
    mean = s1 / n
    var = jnp.maximum(s2 / n - mean * mean, 0.0)   # guard tiny negative values
    inv = jax.lax.rsqrt(var + eps)
    scale = (g_p * inv).reshape(1, O_pad)
    shift = (be_p - mean * g_p * inv).reshape(1, O_pad)

    out = pl.pallas_call(
        _tdnn_bn_kernel,
        out_shape=jax.ShapeDtypeStruct((B, L_pad, O_pad), jnp.float32),
        grid=(B, nLT),
        in_specs=[
            pl.BlockSpec((1, TL, O_pad), lambda bi, lt: (bi, lt, 0)),
            pl.BlockSpec((1, O_pad), lambda bi, lt: (0, 0)),
            pl.BlockSpec((1, O_pad), lambda bi, lt: (0, 0)),
        ],
        out_specs=pl.BlockSpec((1, TL, O_pad), lambda bi, lt: (bi, lt, 0)),
        compiler_params=pltpu.CompilerParams(
            dimension_semantics=("parallel", "parallel"),
            vmem_limit_bytes=48 * 1024 * 1024),
    )(y, scale, shift)

    return out[:, :L, :O]


def tdnn_reference(x, w, b, gamma, beta, *, context_size, dilation, eps=1e-5):
    """Plain-JAX replica of the PyTorch forward (train-mode BN, dropout=identity).

    The matmul inputs are cast to bf16 (f32 accumulation) to mirror the kernel's
    MXU numerics; a pure-f32 reference agrees to ~1e-2 (bf16 input rounding)."""
    B, T, D = x.shape
    L = T - dilation * (context_size - 1)
    cols = [x[:, c * dilation:c * dilation + L, :] for c in range(context_size)]
    u = jnp.concatenate(cols, axis=-1)                        # (B, L, context*D)
    z = jnp.dot(u.astype(jnp.bfloat16), w.astype(jnp.bfloat16),
                preferred_element_type=jnp.float32) + b.reshape(-1)
    y = jnp.maximum(z, 0.0)
    mean = y.mean(axis=(0, 1))
    var = ((y - mean) ** 2).mean(axis=(0, 1))
    return (y - mean) * jax.lax.rsqrt(var + eps) * gamma.reshape(-1) + beta.reshape(-1)


if __name__ == "__main__":
    # Small shapes consistent with the module: input_dim=23 (module default),
    # context_size=5, dilation=1, small output_dim for the test.
    batch, seq_len, input_dim = 2, 16, 23
    output_dim, context_size, dilation = 64, 5, 1

    key = jax.random.PRNGKey(0)
    kx, kw, kb, kg, kbe = jax.random.split(key, 5)

    x = jax.random.normal(kx, (batch, seq_len, input_dim), dtype=jnp.float32)

    fan_in = input_dim * context_size
    bound = 1.0 / (fan_in ** 0.5)
    # nn.Linear(input_dim*context_size, output_dim): stored as (fan_in, O) here.
    w = jax.random.uniform(kw, (fan_in, output_dim), jnp.float32, -bound, bound)
    b = jax.random.uniform(kb, (1, output_dim), jnp.float32, -bound, bound)
    # BatchNorm1d affine params (randomized for a stronger, still deterministic test).
    gamma = jax.random.uniform(kg, (1, output_dim), jnp.float32, 0.5, 1.5)
    beta = 0.1 * jax.random.normal(kbe, (1, output_dim), dtype=jnp.float32)

    out = tdnn_forward(x, w, b, gamma, beta,
                       context_size=context_size, dilation=dilation)
    out = jax.block_until_ready(out)

    ref = tdnn_reference(x, w, b, gamma, beta,
                         context_size=context_size, dilation=dilation)
    new_seq = seq_len - dilation * (context_size - 1)
    assert out.shape == (batch, new_seq, output_dim)
    err = jnp.max(jnp.abs(out - ref))
    assert jnp.allclose(out, ref, atol=2e-3, rtol=2e-3), f"mismatch vs reference, max abs err={err}"

    print("KERNEL_OK")
</pallas_src>

<mosaic_0001>
module attributes {stable_mosaic.version = 11 : i64} {
  func.func @_tdnn_affine_kernel(%arg0: i32, %arg1: i32, %arg2: memref<1x20x128xf32, #tpu.memory_space<vmem>>, %arg3: memref<640x128xbf16, #tpu.memory_space<vmem>>, %arg4: memref<1x128xf32, #tpu.memory_space<vmem>>, %arg5: memref<1x16x128xf32, #tpu.memory_space<vmem>>, %arg6: memref<1x1x1x128xf32, #tpu.memory_space<vmem>>, %arg7: memref<1x1x1x128xf32, #tpu.memory_space<vmem>>, %arg8: memref<16x640xbf16, #tpu.memory_space<vmem>>) attributes {dimension_semantics = [#tpu.dimension_semantics<parallel>, #tpu.dimension_semantics<parallel>], iteration_bounds = array<i64: 2, 1>, scalar_prefetch = 0 : i64, scratch_operands = 1 : i64, tpu.core_type = #tpu.core_type<tc>, window_params = [{transform_indices = @transform_0, window_bounds = array<i64: 1, 20, 128>}, {pipeline_mode = #tpu.pipeline_mode<synchronous>, transform_indices = @transform_1, window_bounds = array<i64: 640, 128>}, {pipeline_mode = #tpu.pipeline_mode<synchronous>, transform_indices = @transform_2, window_bounds = array<i64: 1, 128>}, {transform_indices = @transform_3, window_bounds = array<i64: 1, 16, 128>}, {transform_indices = @transform_4, window_bounds = array<i64: 1, 1, 1, 128>}, {transform_indices = @transform_5, window_bounds = array<i64: 1, 1, 1, 128>}]} {
    %c16_i32 = arith.constant 16 : i32
    %0 = arith.muli %arg1, %c16_i32 : i32
    %1 = tpu.assume_multiple %0, 16 : i32
    %c0_i32 = arith.constant 0 : i32
    %2 = arith.addi %1, %c0_i32 : i32
    %c0 = arith.constant 0 : index
    %3 = arith.index_cast %2 : i32 to index
    %c0_0 = arith.constant 0 : index
    %4 = vector.load %arg2[%c0, %3, %c0_0] : memref<1x20x128xf32, #tpu.memory_space<vmem>>, vector<1x16x128xf32>
    %5 = vector.shape_cast %4 : vector<1x16x128xf32> to vector<16x128xf32>
    %6 = arith.truncf %5 : vector<16x128xf32> to vector<16x128xbf16>
    %c0_1 = arith.constant 0 : index
    %c0_2 = arith.constant 0 : index
    %7 = vector.load %arg8[%c0_1, %c0_2] : memref<16x640xbf16, #tpu.memory_space<vmem>>, vector<16x128xbf16>
    tpu.vector_store %arg8[%c0_1, %c0_2], %6 {strides = array<i32>} : memref<16x640xbf16, #tpu.memory_space<vmem>>, vector<16x128xbf16>,
    %c1_i32 = arith.constant 1 : i32
    %8 = arith.addi %1, %c1_i32 : i32
    %c0_3 = arith.constant 0 : index
    %9 = arith.index_cast %8 : i32 to index
    %c0_4 = arith.constant 0 : index
    %10 = vector.load %arg2[%c0_3, %9, %c0_4] : memref<1x20x128xf32, #tpu.memory_space<vmem>>, vector<1x16x128xf32>
    %11 = vector.shape_cast %10 : vector<1x16x128xf32> to vector<16x128xf32>
    %12 = arith.truncf %11 : vector<16x128xf32> to vector<16x128xbf16>
    %c0_5 = arith.constant 0 : index
    %c128 = arith.constant 128 : index
    %13 = vector.load %arg8[%c0_5, %c128] : memref<16x640xbf16, #tpu.memory_space<vmem>>, vector<16x128xbf16>
    tpu.vector_store %arg8[%c0_5, %c128], %12 {strides = array<i32>} : memref<16x640xbf16, #tpu.memory_space<vmem>>, vector<16x128xbf16>,
    %c2_i32 = arith.constant 2 : i32
    %14 = arith.addi %1, %c2_i32 : i32
    %c0_6 = arith.constant 0 : index
    %15 = arith.index_cast %14 : i32 to index
    %c0_7 = arith.constant 0 : index
    %16 = vector.load %arg2[%c0_6, %15, %c0_7] : memref<1x20x128xf32, #tpu.memory_space<vmem>>, vector<1x16x128xf32>
    %17 = vector.shape_cast %16 : vector<1x16x128xf32> to vector<16x128xf32>
    %18 = arith.truncf %17 : vector<16x128xf32> to vector<16x128xbf16>
    %c0_8 = arith.constant 0 : index
    %c256 = arith.constant 256 : index
    %19 = vector.load %arg8[%c0_8, %c256] : memref<16x640xbf16, #tpu.memory_space<vmem>>, vector<16x128xbf16>
    tpu.vector_store %arg8[%c0_8, %c256], %18 {strides = array<i32>} : memref<16x640xbf16, #tpu.memory_space<vmem>>, vector<16x128xbf16>,
    %c3_i32 = arith.constant 3 : i32
    %20 = arith.addi %1, %c3_i32 : i32
    %c0_9 = arith.constant 0 : index
    %21 = arith.index_cast %20 : i32 to index
    %c0_10 = arith.constant 0 : index
    %22 = vector.load %arg2[%c0_9, %21, %c0_10] : memref<1x20x128xf32, #tpu.memory_space<vmem>>, vector<1x16x128xf32>
    %23 = vector.shape_cast %22 : vector<1x16x128xf32> to vector<16x128xf32>
    %24 = arith.truncf %23 : vector<16x128xf32> to vector<16x128xbf16>
    %c0_11 = arith.constant 0 : index
    %c384 = arith.constant 384 : index
    %25 = vector.load %arg8[%c0_11, %c384] : memref<16x640xbf16, #tpu.memory_space<vmem>>, vector<16x128xbf16>
    tpu.vector_store %arg8[%c0_11, %c384], %24 {strides = array<i32>} : memref<16x640xbf16, #tpu.memory_space<vmem>>, vector<16x128xbf16>,
    %c4_i32 = arith.constant 4 : i32
    %26 = arith.addi %1, %c4_i32 : i32
    %c0_12 = arith.constant 0 : index
    %27 = arith.index_cast %26 : i32 to index
    %c0_13 = arith.constant 0 : index
    %28 = vector.load %arg2[%c0_12, %27, %c0_13] : memref<1x20x128xf32, #tpu.memory_space<vmem>>, vector<1x16x128xf32>
    %29 = vector.shape_cast %28 : vector<1x16x128xf32> to vector<16x128xf32>
    %30 = arith.truncf %29 : vector<16x128xf32> to vector<16x128xbf16>
    %c0_14 = arith.constant 0 : index
    %c512 = arith.constant 512 : index
    %31 = vector.load %arg8[%c0_14, %c512] : memref<16x640xbf16, #tpu.memory_space<vmem>>, vector<16x128xbf16>
    tpu.vector_store %arg8[%c0_14, %c512], %30 {strides = array<i32>} : memref<16x640xbf16, #tpu.memory_space<vmem>>, vector<16x128xbf16>,
    %c0_15 = arith.constant 0 : index
    %c0_16 = arith.constant 0 : index
    %32 = vector.load %arg8[%c0_15, %c0_16] : memref<16x640xbf16, #tpu.memory_space<vmem>>, vector<16x640xbf16>
    %c0_17 = arith.constant 0 : index
    %c0_18 = arith.constant 0 : index
    %33 = vector.load %arg3[%c0_17, %c0_18] : memref<640x128xbf16, #tpu.memory_space<vmem>>, vector<640x128xbf16>
    %cst = arith.constant dense<0.000000e+00> : vector<16x128xf32>
    %34 = tpu.matmul %32, %33, %cst {dimension_numbers = #tpu.dot_dimension_numbers<[1], [0], [0], [1], [0, 0, 1, 1], [], []>} : vector<16x640xbf16>, vector<640x128xbf16>, vector<16x128xf32> -> vector<16x128xf32>
    %c0_19 = arith.constant 0 : index
    %c0_20 = arith.constant 0 : index
    %35 = vector.load %arg4[%c0_19, %c0_20] : memref<1x128xf32, #tpu.memory_space<vmem>>, vector<1x128xf32>
    %36 = vector.broadcast %35 : vector<1x128xf32> to vector<16x128xf32>
    %37 = arith.addf %34, %36 : vector<16x128xf32>
    %cst_21 = arith.constant 0.000000e+00 : f32
    %38 = vector.broadcast %cst_21 : f32 to vector<16x128xf32>
    %39 = arith.maximumf %37, %38 : vector<16x128xf32>
    %c0_22 = arith.constant 0 : index
    %c0_23 = arith.constant 0 : index
    %c0_24 = arith.constant 0 : index
    %40 = vector.load %arg5[%c0_22, %c0_23, %c0_24] : memref<1x16x128xf32, #tpu.memory_space<vmem>>, vector<1x16x128xf32>
    %41 = vector.shape_cast %40 : vector<1x16x128xf32> to vector<16x128xf32>
    %42 = vector.shape_cast %39 : vector<16x128xf32> to vector<1x16x128xf32>
    tpu.vector_store %arg5[%c0_22, %c0_23, %c0_24], %42 {strides = array<i32>} : memref<1x16x128xf32, #tpu.memory_space<vmem>>, vector<1x16x128xf32>,
    %43 = tpu.iota {dimensions = array<i32: 0>} : vector<16x1xi32>
    %c16_i32_25 = arith.constant 16 : i32
    %44 = arith.muli %arg1, %c16_i32_25 : i32
    %c12_i32 = arith.constant 12 : i32
    %45 = arith.subi %c12_i32, %44 : i32
    %c16_i32_26 = arith.constant 16 : i32
    %46 = arith.minsi %c16_i32_26, %45 : i32
    %47 = vector.broadcast %46 : i32 to vector<16x1xi32>
    %48 = arith.cmpi slt, %43, %47 : vector<16x1xi32>
    %cst_27 = arith.constant 0.000000e+00 : f32
    %49 = vector.shape_cast %48 : vector<16x1xi1> to vector<16x1xi1>
    %50 = vector.broadcast %49 : vector<16x1xi1> to vector<16x128xi1>
    %51 = vector.broadcast %cst_27 : f32 to vector<16x128xf32>
    %52 = arith.select %50, %39, %51 : vector<16x128xi1>, vector<16x128xf32>
    %cst_28 = arith.constant dense<0.000000e+00> : vector<128xf32>
    %53 = vector.multi_reduction <add>, %52, %cst_28 [0] : vector<16x128xf32> to vector<128xf32>
    %54 = vector.shape_cast %53 : vector<128xf32> to vector<1x128xf32>
    %c0_29 = arith.constant 0 : index
    %c0_30 = arith.constant 0 : index
    %c0_31 = arith.constant 0 : index
    %c0_32 = arith.constant 0 : index
    %55 = vector.load %arg6[%c0_29, %c0_30, %c0_31, %c0_32] : memref<1x1x1x128xf32, #tpu.memory_space<vmem>>, vector<1x1x1x128xf32>
    %56 = vector.shape_cast %55 : vector<1x1x1x128xf32> to vector<1x128xf32>
    %57 = vector.shape_cast %54 : vector<1x128xf32> to vector<1x1x1x128xf32>
    tpu.vector_store %arg6[%c0_29, %c0_30, %c0_31, %c0_32], %57 {strides = array<i32>} : memref<1x1x1x128xf32, #tpu.memory_space<vmem>>, vector<1x1x1x128xf32>,
    %58 = arith.mulf %52, %52 : vector<16x128xf32>
    %cst_33 = arith.constant dense<0.000000e+00> : vector<128xf32>
    %59 = vector.multi_reduction <add>, %58, %cst_33 [0] : vector<16x128xf32> to vector<128xf32>
    %60 = vector.shape_cast %59 : vector<128xf32> to vector<1x128xf32>
    %c0_34 = arith.constant 0 : index
    %c0_35 = arith.constant 0 : index
    %c0_36 = arith.constant 0 : index
    %c0_37 = arith.constant 0 : index
    %61 = vector.load %arg7[%c0_34, %c0_35, %c0_36, %c0_37] : memref<1x1x1x128xf32, #tpu.memory_space<vmem>>, vector<1x1x1x128xf32>
    %62 = vector.shape_cast %61 : vector<1x1x1x128xf32> to vector<1x128xf32>
    %63 = vector.shape_cast %60 : vector<1x128xf32> to vector<1x1x1x128xf32>
    tpu.vector_store %arg7[%c0_34, %c0_35, %c0_36, %c0_37], %63 {strides = array<i32>} : memref<1x1x1x128xf32, #tpu.memory_space<vmem>>, vector<1x1x1x128xf32>,
    return
  }
  func.func @transform_0(%arg0: i32, %arg1: i32) -> (i32, i32, i32) {
    %c0_i32 = arith.constant 0 : i32
    %c0_i32_0 = arith.constant 0 : i32
    %c0_i32_1 = arith.constant 0 : i32
    return %arg0, %c0_i32, %c0_i32_0 : i32, i32, i32
  }
  func.func @transform_1(%arg0: i32, %arg1: i32) -> (i32, i32) {
    %c0_i32 = arith.constant 0 : i32
    %c0_i32_0 = arith.constant 0 : i32
    %c0_i32_1 = arith.constant 0 : i32
    return %c0_i32, %c0_i32_0 : i32, i32
  }
  func.func @transform_2(%arg0: i32, %arg1: i32) -> (i32, i32) {
    %c0_i32 = arith.constant 0 : i32
    %c0_i32_0 = arith.constant 0 : i32
    %c0_i32_1 = arith.constant 0 : i32
    return %c0_i32, %c0_i32_0 : i32, i32
  }
  func.func @transform_3(%arg0: i32, %arg1: i32) -> (i32, i32, i32) {
    %c0_i32 = arith.constant 0 : i32
    %c0_i32_0 = arith.constant 0 : i32
    return %arg0, %arg1, %c0_i32 : i32, i32, i32
  }
  func.func @transform_4(%arg0: i32, %arg1: i32) -> (i32, i32, i32, i32) {
    %c0_i32 = arith.constant 0 : i32
    %c0_i32_0 = arith.constant 0 : i32
    %c0_i32_1 = arith.constant 0 : i32
    return %arg0, %arg1, %c0_i32, %c0_i32_0 : i32, i32, i32, i32
  }
  func.func @transform_5(%arg0: i32, %arg1: i32) -> (i32, i32, i32, i32) {
    %c0_i32 = arith.constant 0 : i32
    %c0_i32_0 = arith.constant 0 : i32
    %c0_i32_1 = arith.constant 0 : i32
    return %arg0, %arg1, %c0_i32, %c0_i32_0 : i32, i32, i32, i32
  }
}

</mosaic_0001>

<llo_original>
// kernel: tpu_custom_call.1
$region0: #{tpu_custom_call.1}
  #allocation0 [shape = 'u32[]', space=smem, size = 0x4, offset = 0x4, fixed_abs, tag = 'smem constant byte address 0x4 - core index']
  #allocation1 [shape = 'u32[144,128]{1,0:T(1,128)}', space=vmem, size = 0x12000, scoped, tag = 'internal scratch']
  #allocation2 [shape = 'bf16[16,640]{1,0:T(16,128)(2,1)}', space=vmem, size = 0x5000, scoped, tag = 'scratch operand']
  %s0 = inlined_call_operand.vmem [shape: f32[2,20,128], index: 0, kind: input, shape index: {}]
  %s1 = inlined_call_operand.hbm [shape: bf16[640,128], index: 1, kind: input, shape index: {}]
  %s2 = inlined_call_operand.vmem [shape: f32[1,128], index: 2, kind: input, shape index: {}]
  %s3 = inlined_call_operand.hbm [shape: f32[2,16,128], index: 3, kind: output, shape index: {0}]
  %s4 = inlined_call_operand.hbm [shape: f32[2,1,1,128], index: 4, kind: output, shape index: {1}]
  %s5 = inlined_call_operand.hbm [shape: f32[2,1,1,128], index: 5, kind: output, shape index: {2}]
  %6 = xla_tuple %s3, %s4, %s5
  %s7 = sld [smem:[#allocation0]]
  $region65: #{tpu_custom_call.1} parent=0
    _
  %s9 = ssub.s32 1, %s7
  %s10 = scalar_select 0, %s9, %s7
  $region1: #{tpu_custom_call.1} parent=0
    #allocation3 [shape = 'u8[163840]{0}', space=vmem, size = 0x28000, scoped, tag = 'input window, operand 1, single buffered']
    #allocation4 [shape = 's32[2]{0}', space=sflag, size = 0x8, scoped, tag = 'scoped memory for tpu_custom_call.1']
    #allocation5 [shape = 's32[2]{0}', space=sflag, size = 0x8, scoped, tag = 'scoped memory for tpu_custom_call.1']
    #allocation6 [shape = 'u8[16384]{0}', space=vmem, size = 0x4000, scoped, tag = 'output window, operand 0']
    #allocation7 [shape = 'u8[1024]{0}', space=vmem, size = 0x400, scoped, tag = 'output window, operand 1']
    #allocation8 [shape = 's32[2]{0}', space=sflag, size = 0x8, scoped, tag = 'scoped memory for tpu_custom_call.1']
    #allocation9 [shape = 'u8[1024]{0}', space=vmem, size = 0x400, scoped, tag = 'output window, operand 2']
    %11 = vsyncpa [#allocation4], 0
    %12 = vsyncpa [#allocation5], 0
    %s13 = scalar_lea.sflag [#allocation5], 1
    %14 = vsyncpa %s13, 0
    %15 = vsyncpa [#allocation8], 0
    %s16 = scalar_lea.sflag [#allocation8], 1
    %17 = vsyncpa %s16, 0
    loop: start=0, step=1, limit=4
    $region2: #{tpu_custom_call.1} parent=1 // loop_pre_header
      _
    $region3: #{tpu_custom_call.1} parent=1 // loop_header
      %s19 = sphi 0, %s23
      %p20 = scmp.ge.s32.totalorder %s19, 4
      %s26 = sphi 0, %s38
      %s27 = sphi 0, %s34
      %s28 = sphi 0, %s26
      %s29 = sphi 0, %s27
      %s30 = sphi 0, %s28
      %s31 = sphi 0, %s29
      %s41 = sphi 0, %s43
      %s44 = sphi 0, %s41
      %s45 = sphi 0, %s44
      %s61 = sphi 0, %s45
      %s65 = sphi 0, %s65
      %s67 = sphi 0, %s65
      %s68 = sphi 0, %s67
      %s82 = sphi 0, %s68
      %s86 = sphi 0, %s86
      %s88 = sphi 0, %s86
      %s89 = sphi 0, %s88
      %s103 = sphi 0, %s89
      %s111 = sphi 0, %s113
      %s114 = sphi 0, %s111
      %s115 = sphi 0, %s114
      %s131 = sphi 0, %s115
      %s139 = sphi 0, %s141
      %s142 = sphi 0, %s139
      %s143 = sphi 0, %s142
      %s159 = sphi 0, %s143
      %s167 = sphi 0, %s169
      %s170 = sphi 0, %s167
      %s171 = sphi 0, %s170
      %s187 = sphi 0, %s171
    $region4: #{tpu_custom_call.1} parent=1 // loop_header_branch
      %22 = sbr.rel (%p20) target = $region8
    $region5: #{tpu_custom_call.1} parent=1 // loop_body
      %s24 = ssub.s32 %s19, 1
      %s25 = ssub.s32 %s19, 2
      %s32 = sadd.s32 1, %s27
      %p33 = scmp.ge.s32.totalorder %s32, 1
      %s34 = scalar_select %p33, 0, %s32
      %s35 = sadd.s32 1, %s26
      %s36 = scalar_select %p33, %s35, %s26
      %p37 = scmp.ge.s32.totalorder %s36, 2
      %s38 = scalar_select %p37, 0, %s36
      %s39 = ssub.s32 %s26, %s38
      %p40 = scmp.eq.s32.totalorder %s39, 0
      %s42 = sadd.s32 %s41, 1
      %s43 = scalar_select %p40, %s41, %s42
      %p46 = pneg %p40
      %p47 = scmp.eq.s32.totalorder %s19, 1
      %p48 = por %p46, %p47
      %p49 = scmp.ne.s32.totalorder %s41, %s44
      %p50 = scmp.eq.s32.totalorder %s19, 0
      %p51 = por %p49, %p50
      %p52 = scmp.ne.s32.totalorder %s41, %s44
      %p53 = scmp.eq.s32.totalorder %s24, 1
      %p54 = por %p52, %p53
      %p55 = scmp.ne.s32.totalorder %s44, %s45
      %p56 = scmp.eq.s32.totalorder %s24, 0
      %p57 = por %p55, %p56
      %p58 = scmp.ne.s32.totalorder %s44, %s45
      %p59 = scmp.eq.s32.totalorder %s25, 1
      %p60 = por %p58, %p59
      %p62 = scmp.ne.s32.totalorder %s45, %s61
      %p63 = scmp.eq.s32.totalorder %s25, 0
      %p64 = por %p62, %p63
      %s66 = sadd.s32 %s65, 1
      %p69 = scmp.eq.s32.totalorder %s19, 1
      %p70 = scmp.ne.s32.totalorder %s65, %s67
      %p71 = scmp.eq.s32.totalorder %s19, 0
      %p72 = por %p70, %p71
      %p73 = scmp.ne.s32.totalorder %s65, %s67
      %p74 = scmp.eq.s32.totalorder %s24, 1
      %p75 = por %p73, %p74
      %p76 = scmp.ne.s32.totalorder %s67, %s68
      %p77 = scmp.eq.s32.totalorder %s24, 0
      %p78 = por %p76, %p77
      %p79 = scmp.ne.s32.totalorder %s67, %s68
      %p80 = scmp.eq.s32.totalorder %s25, 1
      %p81 = por %p79, %p80
      %p83 = scmp.ne.s32.totalorder %s68, %s82
      %p84 = scmp.eq.s32.totalorder %s25, 0
      %p85 = por %p83, %p84
      %s87 = sadd.s32 %s86, 1
      %p90 = scmp.eq.s32.totalorder %s19, 1
      %p91 = scmp.ne.s32.totalorder %s86, %s88
      %p92 = scmp.eq.s32.totalorder %s19, 0
      %p93 = por %p91, %p92
      %p94 = scmp.ne.s32.totalorder %s86, %s88
      %p95 = scmp.eq.s32.totalorder %s24, 1
      %p96 = por %p94, %p95
      %p97 = scmp.ne.s32.totalorder %s88, %s89
      %p98 = scmp.eq.s32.totalorder %s24, 0
      %p99 = por %p97, %p98
      %p100 = scmp.ne.s32.totalorder %s88, %s89
      %p101 = scmp.eq.s32.totalorder %s25, 1
      %p102 = por %p100, %p101
      %p104 = scmp.ne.s32.totalorder %s89, %s103
      %p105 = scmp.eq.s32.totalorder %s25, 0
      %p106 = por %p104, %p105
      %s107 = ssub.s32 %s26, %s38
      %s108 = ssub.s32 %s27, %s34
      %s109 = sor.u32 %s107, %s108
      %p110 = scmp.eq.s32.totalorder %s109, 0
      %s112 = sadd.s32 %s111, 1
      %s113 = scalar_select %p110, %s111, %s112
      %p116 = pneg %p110
      %p117 = scmp.eq.s32.totalorder %s19, 1
      %p118 = por %p116, %p117
      %p119 = scmp.ne.s32.totalorder %s111, %s114
      %p120 = scmp.eq.s32.totalorder %s19, 0
      %p121 = por %p119, %p120
      %p122 = scmp.ne.s32.totalorder %s111, %s114
      %p123 = scmp.eq.s32.totalorder %s24, 1
      %p124 = por %p122, %p123
      %p125 = scmp.ne.s32.totalorder %s114, %s115
      %p126 = scmp.eq.s32.totalorder %s24, 0
      %p127 = por %p125, %p126
      %p128 = scmp.ne.s32.totalorder %s114, %s115
      %p129 = scmp.eq.s32.totalorder %s25, 1
      %p130 = por %p128, %p129
      %p132 = scmp.ne.s32.totalorder %s115, %s131
      %p133 = scmp.eq.s32.totalorder %s25, 0
      %p134 = por %p132, %p133
      %s135 = ssub.s32 %s26, %s38
      %s136 = ssub.s32 %s27, %s34
      %s137 = sor.u32 %s135, %s136
      %p138 = scmp.eq.s32.totalorder %s137, 0
      %s140 = sadd.s32 %s139, 1
      %s141 = scalar_select %p138, %s139, %s140
      %p144 = pneg %p138
      %p145 = scmp.eq.s32.totalorder %s19, 1
      %p146 = por %p144, %p145
      %p147 = scmp.ne.s32.totalorder %s139, %s142
      %p148 = scmp.eq.s32.totalorder %s19, 0
      %p149 = por %p147, %p148
      %p150 = scmp.ne.s32.totalorder %s139, %s142
      %p151 = scmp.eq.s32.totalorder %s24, 1
      %p152 = por %p150, %p151
      %p153 = scmp.ne.s32.totalorder %s142, %s143
      %p154 = scmp.eq.s32.totalorder %s24, 0
      %p155 = por %p153, %p154
      %p156 = scmp.ne.s32.totalorder %s142, %s143
      %p157 = scmp.eq.s32.totalorder %s25, 1
      %p158 = por %p156, %p157
      %p160 = scmp.ne.s32.totalorder %s143, %s159
      %p161 = scmp.eq.s32.totalorder %s25, 0
      %p162 = por %p160, %p161
      %s163 = ssub.s32 %s26, %s38
      %s164 = ssub.s32 %s27, %s34
      %s165 = sor.u32 %s163, %s164
      %p166 = scmp.eq.s32.totalorder %s165, 0
      %s168 = sadd.s32 %s167, 1
      %s169 = scalar_select %p166, %s167, %s168
      %p172 = pneg %p166
      %p173 = scmp.eq.s32.totalorder %s19, 1
      %p174 = por %p172, %p173
      %p175 = scmp.ne.s32.totalorder %s167, %s170
      %p176 = scmp.eq.s32.totalorder %s19, 0
      %p177 = por %p175, %p176
      %p178 = scmp.ne.s32.totalorder %s167, %s170
      %p179 = scmp.eq.s32.totalorder %s24, 1
      %p180 = por %p178, %p179
      %p181 = scmp.ne.s32.totalorder %s170, %s171
      %p182 = scmp.eq.s32.totalorder %s24, 0
      %p183 = por %p181, %p182
      %p184 = scmp.ne.s32.totalorder %s170, %s171
      %p185 = scmp.eq.s32.totalorder %s25, 1
      %p186 = por %p184, %p185
      %p188 = scmp.ne.s32.totalorder %s171, %s187
      %p189 = scmp.eq.s32.totalorder %s25, 0
      %p190 = por %p188, %p189
      %p191 = scmp.le.s32.totalorder 1, %s19
      %p192 = scmp.lt.s32.totalorder %s19, 3
      %p193 = pnand %p191, %p192
      %p194 = pneg %p193
      // Predicated region
      $region9: #{tpu_custom_call.1} parent=5 // pred_check
        _
      $region10: #{tpu_custom_call.1} parent=5 // pred_check_branch
        %196 = sbr.rel (%p193) target = $region12
      $region11: #{tpu_custom_call.1} parent=5 // pred_region
        %s197 = ssub.s32 %s19, 1
        // Predicated region
        $region13: #{tpu_custom_call.1} parent=11 // pred_check
          %p198 = pneg %p78
        $region14: #{tpu_custom_call.1} parent=11 // pred_check_branch
          %200 = sbr.rel (%p198) target = $region16
        $region15: #{tpu_custom_call.1} parent=11 // pred_region
          %s202 = ssub.s32 5120, 5120
          %203 = vsyncadd [#allocation4], %s202
          %s204 = sshll.u32 [#allocation3], 4
          %s205 = int_to_ptr.vmem [resolvable:$true] %s204
          %210 = dma.hbm_to_vmem [thread:$0]  %s1, 5120, %s205, [#allocation4], 64, 64, 4
        $region16: #{tpu_custom_call.1} parent=11 // pred_fallthru
          _
        // Predicated region
        $region17: #{tpu_custom_call.1} parent=11 // pred_check
          %p211 = pneg %p99
        $region18: #{tpu_custom_call.1} parent=11 // pred_check_branch
          %213 = sbr.rel (%p211) target = $region20
        $region19: #{tpu_custom_call.1} parent=11 // pred_region
          _
        $region20: #{tpu_custom_call.1} parent=11 // pred_fallthru
          _
      $region12: #{tpu_custom_call.1} parent=5 // pred_fallthru
        _
      %p214 = scmp.lt.s32.totalorder %s19, 2
      // Predicated region
      $region21: #{tpu_custom_call.1} parent=5 // pred_check
        %p215 = pneg %p214
      $region22: #{tpu_custom_call.1} parent=5 // pred_check_branch
        %217 = sbr.rel (%p215) target = $region24
      $region23: #{tpu_custom_call.1} parent=5 // pred_region
        // Predicated region
        $region25: #{tpu_custom_call.1} parent=23 // pred_check
          %p218 = pneg %p51
        $region26: #{tpu_custom_call.1} parent=23 // pred_check_branch
          %220 = sbr.rel (%p218) target = $region28
        $region27: #{tpu_custom_call.1} parent=23 // pred_region
          %p221 = scmp.lt.s32.totalorder %s26, 1
          %s222 = scalar_select %p221, %s26, 1
          %s223 = smul.addr %s222, 3
          %s224 = smul.addr %s223, 8
          %s225 = scalar_lea.vmem %s0, %s224
        $region28: #{tpu_custom_call.1} parent=23 // pred_fallthru
          _
      $region24: #{tpu_custom_call.1} parent=5 // pred_fallthru
        _
      %p226 = scmp.le.s32.totalorder 1, %s19
      %p227 = scmp.lt.s32.totalorder %s19, 3
      %p228 = pnand %p226, %p227
      %p229 = pneg %p228
      // Predicated region
      $region29: #{tpu_custom_call.1} parent=5 // pred_check
        _
      $region30: #{tpu_custom_call.1} parent=5 // pred_check_branch
        %231 = sbr.rel (%p228) target = $region32
      $region31: #{tpu_custom_call.1} parent=5 // pred_region
        %s232 = ssub.s32 %s19, 1
        // Predicated region
        $region33: #{tpu_custom_call.1} parent=31 // pred_check
          %p233 = pneg %p78
        $region34: #{tpu_custom_call.1} parent=31 // pred_check_branch
          %235 = sbr.rel (%p233) target = $region36
        $region35: #{tpu_custom_call.1} parent=31 // pred_region
          %236 = dma.done [#allocation4], 5120
        $region36: #{tpu_custom_call.1} parent=31 // pred_fallthru
          _
        %p237 = scmp.lt.s32.totalorder %s28, 1
        %s238 = scalar_select %p237, %s28, 1
        %s239 = smul.addr %s238, 3
        %s240 = smul.addr %s239, 8
        %s241 = scalar_lea.vmem %s0, %s240
        %p242 = pneg %p57
        %p243 = pneg %p54
        %p244 = pneg %p78
        %p245 = pneg %p75
        %p246 = pneg %p99
        %p247 = pneg %p96
        %p248 = pneg %p127
        %p249 = pneg %p124
        %s250 = sand.u32 %s114, 1
        %s251 = scalar_lea.sflag [#allocation5], %s250
        %s252 = sand.u32 %s114, 1
        %s253 = smul.addr %s252, 16
        %s254 = scalar_lea.vmem [#allocation6], %s253
        %p255 = pneg %p155
        %p256 = pneg %p152
        %s257 = sand.u32 %s24, 1
        %s258 = scalar_lea.sflag [#allocation8], %s257
        %s259 = sand.u32 %s142, 1
        %s260 = scalar_lea.vmem [#allocation7], %s259
        %p261 = pneg %p183
        %p262 = pneg %p180
        %s263 = sand.u32 %s24, 1
        %s264 = scalar_lea.sflag [#allocation8], %s263
        %s265 = sand.u32 %s170, 1
        %s266 = scalar_lea.vmem [#allocation9], %s265
        %p267 = scmp.lt.s32.totalorder %s28, 1
        %s268 = scalar_select %p267, %s28, 1
        %s269 = smul.addr %s268, 3
        %s270 = smul.addr %s269, 8
        %s271 = scalar_lea.vmem %s0, %s270
        %s272 = smul.u32 2, %s29
        %s274 = smul.u32 %s29, 16
        %s275 = scalar_lea.vmem %s271, %s274
        %v276 = vld [vmem:[%s275] sm:$0xff]
        %v277 = vld [vmem:[%s275 + $0x8] sm:$0xff]
        %v278 = vpack.c.bf16 %v277, %v276
        %279 = vst [vmem:[#allocation2] sm:$0xff] %v278
        %s280 = sadd.s32 %s274, 1
        %s281 = scalar_lea.vmem %s271, %s280
        %v282 = vld [vmem:[%s281] sm:$0xff]
        %v283 = vld [vmem:[%s281 + $0x8] sm:$0xff]
        %v284 = vpack.c.bf16 %v283, %v282
        %285 = vst [vmem:[#allocation2 + $0x8] sm:$0xff] %v284
        %s286 = sadd.s32 %s274, 2
        %s287 = scalar_lea.vmem %s271, %s286
        %v288 = vld [vmem:[%s287] sm:$0xff]
        %v289 = vld [vmem:[%s287 + $0x8] sm:$0xff]
        %v290 = vpack.c.bf16 %v289, %v288
        %291 = vst [vmem:[#allocation2 + $0x10] sm:$0xff] %v290
        %s292 = sadd.s32 %s274, 3
        %s293 = scalar_lea.vmem %s271, %s292
        %v294 = vld [vmem:[%s293] sm:$0xff]
        %v295 = vld [vmem:[%s293 + $0x8] sm:$0xff]
        %v296 = vpack.c.bf16 %v295, %v294
        %297 = vst [vmem:[#allocation2 + $0x18] sm:$0xff] %v296
        %s298 = sadd.s32 %s274, 4
        %s299 = scalar_lea.vmem %s271, %s298
        %v300 = vld [vmem:[%s299] sm:$0xff]
        %v301 = vld [vmem:[%s299 + $0x8] sm:$0xff]
        %v302 = vpack.c.bf16 %v301, %v300
        %303 = vst [vmem:[#allocation2 + $0x20] sm:$0xff] %v302
        %v304 = vld [vmem:[#allocation2] sm:$0xff]
        %v305 = vld [vmem:[#allocation2 + $0x8] sm:$0xff]
        %v306 = vld [vmem:[#allocation2 + $0x10] sm:$0xff]
        %v307 = vld [vmem:[#allocation2 + $0x18] sm:$0xff]
        %v308 = vld [vmem:[#allocation2 + $0x20] sm:$0xff]
        %v309 = vld [vmem:[#allocation3] sm:$0xf]
        %v310 = vld [vmem:[#allocation3 + $0x4] sm:$0xf]
        %v311 = vld [vmem:[#allocation3 + $0x8] sm:$0xf]
        %v312 = vld [vmem:[#allocation3 + $0xc] sm:$0xf]
        %v313 = vld [vmem:[#allocation3 + $0x10] sm:$0xf]
        %v314 = vld [vmem:[#allocation3 + $0x14] sm:$0xf]
        %v315 = vld [vmem:[#allocation3 + $0x18] sm:$0xf]
        %v316 = vld [vmem:[#allocation3 + $0x1c] sm:$0xf]
        %v317 = vld [vmem:[#allocation3 + $0x20] sm:$0xf]
        %v318 = vld [vmem:[#allocation3 + $0x24] sm:$0xf]
        %v319 = vld [vmem:[#allocation3 + $0x28] sm:$0xf]
        %v320 = vld [vmem:[#allocation3 + $0x2c] sm:$0xf]
        %v321 = vld [vmem:[#allocation3 + $0x30] sm:$0xf]
        %v322 = vld [vmem:[#allocation3 + $0x34] sm:$0xf]
        %v323 = vld [vmem:[#allocation3 + $0x38] sm:$0xf]
        %v324 = vld [vmem:[#allocation3 + $0x3c] sm:$0xf]
        %v325 = vld [vmem:[#allocation3 + $0x40] sm:$0xf]
        %v326 = vld [vmem:[#allocation3 + $0x44] sm:$0xf]
        %v327 = vld [vmem:[#allocation3 + $0x48] sm:$0xf]
        %v328 = vld [vmem:[#allocation3 + $0x4c] sm:$0xf]
        %v329 = vld [vmem:[#allocation3 + $0x50] sm:$0xf]
        %v330 = vld [vmem:[#allocation3 + $0x54] sm:$0xf]
        %v331 = vld [vmem:[#allocation3 + $0x58] sm:$0xf]
        %v332 = vld [vmem:[#allocation3 + $0x5c] sm:$0xf]
        %v333 = vld [vmem:[#allocation3 + $0x60] sm:$0xf]
        %v334 = vld [vmem:[#allocation3 + $0x64] sm:$0xf]
        %v335 = vld [vmem:[#allocation3 + $0x68] sm:$0xf]
        %v336 = vld [vmem:[#allocation3 + $0x6c] sm:$0xf]
        %v337 = vld [vmem:[#allocation3 + $0x70] sm:$0xf]
        %v338 = vld [vmem:[#allocation3 + $0x74] sm:$0xf]
        %v339 = vld [vmem:[#allocation3 + $0x78] sm:$0xf]
        %v340 = vld [vmem:[#allocation3 + $0x7c] sm:$0xf]
        %v341 = vld [vmem:[#allocation3 + $0x80] sm:$0xf]
        %v342 = vld [vmem:[#allocation3 + $0x84] sm:$0xf]
        %v343 = vld [vmem:[#allocation3 + $0x88] sm:$0xf]
        %v344 = vld [vmem:[#allocation3 + $0x8c] sm:$0xf]
        %v345 = vld [vmem:[#allocation3 + $0x90] sm:$0xf]
        %v346 = vld [vmem:[#allocation3 + $0x94] sm:$0xf]
        %v347 = vld [vmem:[#allocation3 + $0x98] sm:$0xf]
        %v348 = vld [vmem:[#allocation3 + $0x9c] sm:$0xf]
        %v349 = vld [vmem:[#allocation3 + $0xa0] sm:$0xf]
        %v350 = vld [vmem:[#allocation3 + $0xa4] sm:$0xf]
        %v351 = vld [vmem:[#allocation3 + $0xa8] sm:$0xf]
        %v352 = vld [vmem:[#allocation3 + $0xac] sm:$0xf]
        %v353 = vld [vmem:[#allocation3 + $0xb0] sm:$0xf]
        %v354 = vld [vmem:[#allocation3 + $0xb4] sm:$0xf]
        %v355 = vld [vmem:[#allocation3 + $0xb8] sm:$0xf]
        %v356 = vld [vmem:[#allocation3 + $0xbc] sm:$0xf]
        %v357 = vld [vmem:[#allocation3 + $0xc0] sm:$0xf]
        %v358 = vld [vmem:[#allocation3 + $0xc4] sm:$0xf]
        %v359 = vld [vmem:[#allocation3 + $0xc8] sm:$0xf]
        %v360 = vld [vmem:[#allocation3 + $0xcc] sm:$0xf]
        %v361 = vld [vmem:[#allocation3 + $0xd0] sm:$0xf]
        %v362 = vld [vmem:[#allocation3 + $0xd4] sm:$0xf]
        %v363 = vld [vmem:[#allocation3 + $0xd8] sm:$0xf]
        %v364 = vld [vmem:[#allocation3 + $0xdc] sm:$0xf]
        %v365 = vld [vmem:[#allocation3 + $0xe0] sm:$0xf]
        %v366 = vld [vmem:[#allocation3 + $0xe4] sm:$0xf]
        %v367 = vld [vmem:[#allocation3 + $0xe8] sm:$0xf]
        %v368 = vld [vmem:[#allocation3 + $0xec] sm:$0xf]
        %v369 = vld [vmem:[#allocation3 + $0xf0] sm:$0xf]
        %v370 = vld [vmem:[#allocation3 + $0xf4] sm:$0xf]
        %v371 = vld [vmem:[#allocation3 + $0xf8] sm:$0xf]
        %v372 = vld [vmem:[#allocation3 + $0xfc] sm:$0xf]
        %v373 = vld [vmem:[#allocation3 + $0x100] sm:$0xf]
        %v374 = vld [vmem:[#allocation3 + $0x104] sm:$0xf]
        %v375 = vld [vmem:[#allocation3 + $0x108] sm:$0xf]
        %v376 = vld [vmem:[#allocation3 + $0x10c] sm:$0xf]
        %v377 = vld [vmem:[#allocation3 + $0x110] sm:$0xf]
        %v378 = vld [vmem:[#allocation3 + $0x114] sm:$0xf]
        %v379 = vld [vmem:[#allocation3 + $0x118] sm:$0xf]
        %v380 = vld [vmem:[#allocation3 + $0x11c] sm:$0xf]
        %v381 = vld [vmem:[#allocation3 + $0x120] sm:$0xf]
        %v382 = vld [vmem:[#allocation3 + $0x124] sm:$0xf]
        %v383 = vld [vmem:[#allocation3 + $0x128] sm:$0xf]
        %v384 = vld [vmem:[#allocation3 + $0x12c] sm:$0xf]
        %v385 = vld [vmem:[#allocation3 + $0x130] sm:$0xf]
        %v386 = vld [vmem:[#allocation3 + $0x134] sm:$0xf]
        %v387 = vld [vmem:[#allocation3 + $0x138] sm:$0xf]
        %v388 = vld [vmem:[#allocation3 + $0x13c] sm:$0xf]
        %v389 = vld [vmem:[%s2] sm:$0x1]
        %v391 = vlaneseq
        %v392 = vshrl.u32 %v391, 7
        %v393 = vsub.s32 0, %v392
        %v394 = vrot.slane %v389, %v393
        %v476 = vunpack.c.l.b16 %v309
        %v477 = vunpack.c.l.b16 %v310
        %v478 = vunpack.c.l.b16 %v311
        %v479 = vunpack.c.l.b16 %v312
        %v480 = vunpack.c.l.b16 %v313
        %v481 = vunpack.c.l.b16 %v314
        %v482 = vunpack.c.l.b16 %v315
        %v483 = vunpack.c.l.b16 %v316
        %v484 = vunpack.c.l.b16 %v317
        %v485 = vunpack.c.l.b16 %v318
        %v486 = vunpack.c.l.b16 %v319
        %v487 = vunpack.c.l.b16 %v320
        %v488 = vunpack.c.l.b16 %v321
        %v489 = vunpack.c.l.b16 %v322
        %v490 = vunpack.c.l.b16 %v323
        %v491 = vunpack.c.l.b16 %v324
        %v492 = vunpack.c.l.b16 %v325
        %v493 = vunpack.c.l.b16 %v326
        %v494 = vunpack.c.l.b16 %v327
        %v495 = vunpack.c.l.b16 %v328
        %v496 = vunpack.c.l.b16 %v329
        %v497 = vunpack.c.l.b16 %v330
        %v498 = vunpack.c.l.b16 %v331
        %v499 = vunpack.c.l.b16 %v332
        %v500 = vunpack.c.l.b16 %v333
        %v501 = vunpack.c.l.b16 %v334
        %v502 = vunpack.c.l.b16 %v335
        %v503 = vunpack.c.l.b16 %v336
        %v504 = vunpack.c.l.b16 %v337
        %v505 = vunpack.c.l.b16 %v338
        %v506 = vunpack.c.l.b16 %v339
        %v507 = vunpack.c.l.b16 %v340
        %v508 = vunpack.c.l.b16 %v341
        %v509 = vunpack.c.l.b16 %v342
        %v510 = vunpack.c.l.b16 %v343
        %v511 = vunpack.c.l.b16 %v344
        %v512 = vunpack.c.l.b16 %v345
        %v513 = vunpack.c.l.b16 %v346
        %v514 = vunpack.c.l.b16 %v347
        %v515 = vunpack.c.l.b16 %v348
        %v516 = vunpack.c.l.b16 %v349
        %v517 = vunpack.c.l.b16 %v350
        %v518 = vunpack.c.l.b16 %v351
        %v519 = vunpack.c.l.b16 %v352
        %v520 = vunpack.c.l.b16 %v353
        %v521 = vunpack.c.l.b16 %v354
        %v522 = vunpack.c.l.b16 %v355
        %v523 = vunpack.c.l.b16 %v356
        %v524 = vunpack.c.l.b16 %v357
        %v525 = vunpack.c.l.b16 %v358
        %v526 = vunpack.c.l.b16 %v359
        %v527 = vunpack.c.l.b16 %v360
        %v528 = vunpack.c.l.b16 %v361
        %v529 = vunpack.c.l.b16 %v362
        %v530 = vunpack.c.l.b16 %v363
        %v531 = vunpack.c.l.b16 %v364
        %v532 = vunpack.c.l.b16 %v365
        %v533 = vunpack.c.l.b16 %v366
        %v534 = vunpack.c.l.b16 %v367
        %v535 = vunpack.c.l.b16 %v368
        %v536 = vunpack.c.l.b16 %v369
        %v537 = vunpack.c.l.b16 %v370
        %v538 = vunpack.c.l.b16 %v371
        %v539 = vunpack.c.l.b16 %v372
        %v540 = vunpack.c.l.b16 %v373
        %v541 = vunpack.c.l.b16 %v374
        %v542 = vunpack.c.l.b16 %v375
        %v543 = vunpack.c.l.b16 %v376
        %v544 = vunpack.c.l.b16 %v377
        %v545 = vunpack.c.l.b16 %v378
        %v546 = vunpack.c.l.b16 %v379
        %v547 = vunpack.c.l.b16 %v380
        %v548 = vunpack.c.l.b16 %v381
        %v549 = vunpack.c.l.b16 %v382
        %v550 = vunpack.c.l.b16 %v383
        %v551 = vunpack.c.l.b16 %v384
        %v552 = vunpack.c.l.b16 %v385
        %v553 = vunpack.c.l.b16 %v386
        %v554 = vunpack.c.l.b16 %v387
        %v555 = vunpack.c.l.b16 %v388
        %v556 = vpack.c.b16 %v477, %v476
        %v557 = vpack.c.b16 %v479, %v478
        %v558 = vpack.c.b16 %v481, %v480
        %v559 = vpack.c.b16 %v483, %v482
        %v560 = vpack.c.b16 %v485, %v484
        %v561 = vpack.c.b16 %v487, %v486
        %v562 = vpack.c.b16 %v489, %v488
        %v563 = vpack.c.b16 %v491, %v490
        %v564 = vpack.c.b16 %v493, %v492
        %v565 = vpack.c.b16 %v495, %v494
        %v566 = vpack.c.b16 %v497, %v496
        %v567 = vpack.c.b16 %v499, %v498
        %v568 = vpack.c.b16 %v501, %v500
        %v569 = vpack.c.b16 %v503, %v502
        %v570 = vpack.c.b16 %v505, %v504
        %v571 = vpack.c.b16 %v507, %v506
        %v572 = vpack.c.b16 %v509, %v508
        %v573 = vpack.c.b16 %v511, %v510
        %v574 = vpack.c.b16 %v513, %v512
        %v575 = vpack.c.b16 %v515, %v514
        %v576 = vpack.c.b16 %v517, %v516
        %v577 = vpack.c.b16 %v519, %v518
        %v578 = vpack.c.b16 %v521, %v520
        %v579 = vpack.c.b16 %v523, %v522
        %v580 = vpack.c.b16 %v525, %v524
        %v581 = vpack.c.b16 %v527, %v526
        %v582 = vpack.c.b16 %v529, %v528
        %v583 = vpack.c.b16 %v531, %v530
        %v584 = vpack.c.b16 %v533, %v532
        %v585 = vpack.c.b16 %v535, %v534
        %v586 = vpack.c.b16 %v537, %v536
        %v587 = vpack.c.b16 %v539, %v538
        %v588 = vpack.c.b16 %v541, %v540
        %v589 = vpack.c.b16 %v543, %v542
        %v590 = vpack.c.b16 %v545, %v544
        %v591 = vpack.c.b16 %v547, %v546
        %v592 = vpack.c.b16 %v549, %v548
        %v593 = vpack.c.b16 %v551, %v550
        %v594 = vpack.c.b16 %v553, %v552
        %v595 = vpack.c.b16 %v555, %v554
        %636 = vmatprep.subr.bf16.mxu0 0
        %637 = vmatpush1.bf16.msra.mxu0 %v556
        %638 = vmatprep.subr.bf16.mxu0 0
        %639 = vmatpush1.bf16.msra.mxu0 %v557
        %640 = vmatprep.subr.bf16.mxu0 0
        %641 = vmatpush1.bf16.msra.mxu0 %v558
        %642 = vmatprep.subr.bf16.mxu0 0
        %643 = vmatpush1.bf16.msra.mxu0 %v559
        %644 = vmatprep.subr.bf16.mxu0 0
        %645 = vmatpush1.bf16.msra.mxu0 %v560
        %646 = vmatprep.subr.bf16.mxu0 0
        %647 = vmatpush1.bf16.msra.mxu0 %v561
        %648 = vmatprep.subr.bf16.mxu0 0
        %649 = vmatpush1.bf16.msra.mxu0 %v562
        %650 = vmatprep.subr.bf16.mxu0 0
        %651 = vmatpush1.bf16.msra.mxu0 %v563
        %652 = vmatprep.subr.bf16.mxu0 0
        %653 = vmatpush1.bf16.msra.mxu0 %v564
        %654 = vmatprep.subr.bf16.mxu0 0
        %655 = vmatpush1.bf16.msra.mxu0 %v565
        %656 = vmatprep.subr.bf16.mxu0 0
        %657 = vmatpush1.bf16.msra.mxu0 %v566
        %658 = vmatprep.subr.bf16.mxu0 0
        %659 = vmatpush1.bf16.msra.mxu0 %v567
        %660 = vmatprep.subr.bf16.mxu0 0
        %661 = vmatpush1.bf16.msra.mxu0 %v568
        %662 = vmatprep.subr.bf16.mxu0 0
        %663 = vmatpush1.bf16.msra.mxu0 %v569
        %664 = vmatprep.subr.bf16.mxu0 0
        %665 = vmatpush1.bf16.msra.mxu0 %v570
        %666 = vmatprep.subr.bf16.mxu0 0
        %667 = vmatpush1.bf16.msra.mxu0 %v571
        %668 = vmatprep.mubr.bf16.mxu0 %v305
        %669 = vmatmul.mubr.bf16.gmra.mrb[0].mxu0 %v304
        %v670 = vpop.f32.mrb[0].mxu0
        %v671 = vadd.f32 %v394, %v670
        %v672 = vpop.f32.mrb[0].mxu0
        %v673 = vpop.f32.mrb[0].mxu0
        %v674 = vadd.f32 %v394, %v673
        %v675 = vpop.f32.mrb[0].mxu0
        %676 = vdwg.mxu0
        %677 = vmatprep.subr.bf16.mxu0 0
        %678 = vmatpush1.bf16.msra.mxu0 %v572
        %679 = vmatprep.subr.bf16.mxu0 0
        %680 = vmatpush1.bf16.msra.mxu0 %v573
        %681 = vmatprep.subr.bf16.mxu0 0
        %682 = vmatpush1.bf16.msra.mxu0 %v574
        %683 = vmatprep.subr.bf16.mxu0 0
        %684 = vmatpush1.bf16.msra.mxu0 %v575
        %685 = vmatprep.subr.bf16.mxu0 0
        %686 = vmatpush1.bf16.msra.mxu0 %v576
        %687 = vmatprep.subr.bf16.mxu0 0
        %688 = vmatpush1.bf16.msra.mxu0 %v577
        %689 = vmatprep.subr.bf16.mxu0 0
        %690 = vmatpush1.bf16.msra.mxu0 %v578
        %691 = vmatprep.subr.bf16.mxu0 0
        %692 = vmatpush1.bf16.msra.mxu0 %v579
        %693 = vmatprep.subr.bf16.mxu0 0
        %694 = vmatpush1.bf16.msra.mxu0 %v580
        %695 = vmatprep.subr.bf16.mxu0 0
        %696 = vmatpush1.bf16.msra.mxu0 %v581
        %697 = vmatprep.subr.bf16.mxu0 0
        %698 = vmatpush1.bf16.msra.mxu0 %v582
        %699 = vmatprep.subr.bf16.mxu0 0
        %700 = vmatpush1.bf16.msra.mxu0 %v583
        %701 = vmatprep.subr.bf16.mxu0 0
        %702 = vmatpush1.bf16.msra.mxu0 %v584
        %703 = vmatprep.subr.bf16.mxu0 0
        %704 = vmatpush1.bf16.msra.mxu0 %v585
        %705 = vmatprep.subr.bf16.mxu0 0
        %706 = vmatpush1.bf16.msra.mxu0 %v586
        %707 = vmatprep.subr.bf16.mxu0 0
        %708 = vmatpush1.bf16.msra.mxu0 %v587
        %709 = vmatprep.mubr.bf16.mxu0 %v307
        %710 = vmatmul.mubr.bf16.gmra.mrb[0].mxu0 %v306
        %v711 = vpop.f32.mrb[0].mxu0
        %v712 = vadd.f32 %v671, %v711
        %v713 = vpop.f32.mrb[0].mxu0
        %v714 = vpop.f32.mrb[0].mxu0
        %v715 = vadd.f32 %v674, %v714
        %v716 = vpop.f32.mrb[0].mxu0
        %717 = vdwg.mxu0
        %718 = vmatprep.subr.bf16.mxu0 0
        %719 = vmatpush1.bf16.msra.mxu0 %v588
        %720 = vmatprep.subr.bf16.mxu0 0
        %721 = vmatpush1.bf16.msra.mxu0 %v589
        %722 = vmatprep.subr.bf16.mxu0 0
        %723 = vmatpush1.bf16.msra.mxu0 %v590
        %724 = vmatprep.subr.bf16.mxu0 0
        %725 = vmatpush1.bf16.msra.mxu0 %v591
        %726 = vmatprep.subr.bf16.mxu0 0
        %727 = vmatpush1.bf16.msra.mxu0 %v592
        %728 = vmatprep.subr.bf16.mxu0 0
        %729 = vmatpush1.bf16.msra.mxu0 %v593
        %730 = vmatprep.subr.bf16.mxu0 0
        %731 = vmatpush1.bf16.msra.mxu0 %v594
        %732 = vmatprep.subr.bf16.mxu0 0
        %733 = vmatpush1.bf16.msra.mxu0 %v595
        %734 = vmatprep.subr.bf16.mxu0 0
        %735 = vmatpush1.bf16.msra.mxu0 0
        %736 = vmatprep.subr.bf16.mxu0 0
        %737 = vmatpush1.bf16.msra.mxu0 0
        %738 = vmatprep.subr.bf16.mxu0 0
        %739 = vmatpush1.bf16.msra.mxu0 0
        %740 = vmatprep.subr.bf16.mxu0 0
        %741 = vmatpush1.bf16.msra.mxu0 0
        %742 = vmatprep.subr.bf16.mxu0 0
        %743 = vmatpush1.bf16.msra.mxu0 0
        %744 = vmatprep.subr.bf16.mxu0 0
        %745 = vmatpush1.bf16.msra.mxu0 0
        %746 = vmatprep.subr.bf16.mxu0 0
        %747 = vmatpush1.bf16.msra.mxu0 0
        %748 = vmatprep.subr.bf16.mxu0 0
        %749 = vmatpush1.bf16.msra.mxu0 0
        %750 = vmatprep.mubr.bf16.mxu0 0
        %751 = vmatmul.mubr.bf16.gmra.mrb[0].mxu0 %v308
        %v752 = vpop.f32.mrb[0].mxu0
        %v753 = vadd.f32 %v712, %v752
        %v754 = vpop.f32.mrb[0].mxu0
        %v755 = vpop.f32.mrb[0].mxu0
        %v756 = vadd.f32 %v715, %v755
        %v757 = vpop.f32.mrb[0].mxu0
        %758 = vdwg.mxu0
        %v759 = vmax.f32 %v753, 0.0
        %v760 = vmax.f32 %v756, 0.0
        %761 = vst [vmem:[%s254] sm:$0xff] %v759
        %762 = vst [vmem:[%s254 + $0x8] sm:$0xff] %v760
        %v763 = vlaneseq
        %v764 = vshrl.u32 %v763, 7
        %v765 = vadd.s32 %v764, 8
        %s766 = ssub.s32 12, %s274
        %p767 = scmp.lt.s32.totalorder %s766, 16
        %s768 = scalar_select %p767, %s766, 16
        %v769 = vstv %s768
        %vm770 = vcmp.lt.s32.totalorder %v764, %v769
        %vm771 = vcmp.lt.s32.totalorder %v765, %v769
        %v772 = vsel %vm770, 1, 0
        %v773 = vsel %vm771, 1, 0
        %vm774 = vcmp.eq.s32.totalorder %v772, 1
        %vm775 = vcmp.eq.s32.totalorder %v773, 1
        %v776 = vsel %vm774, %v759, 0.0
        %v777 = vsel %vm775, %v760, 0.0
        %v778 = vadd.f32 %v776, %v777
        %v779 = vrot.slane %v778, 4
        %v780 = vadd.f32 %v778, %v779
        %v781 = vrot.slane %v780, 2
        %v782 = vadd.f32 %v780, %v781
        %v783 = vrot.slane %v782, 1
        %v784 = vadd.f32 %v782, %v783
        %785 = vst [vmem:[%s260] sm:$0x1] %v784
        %v786 = vmul.f32 %v776, %v776
        %v787 = vmul.f32 %v777, %v777
        %v788 = vadd.f32 %v786, %v787
        %v789 = vrot.slane %v788, 4
        %v790 = vadd.f32 %v788, %v789
        %v791 = vrot.slane %v790, 2
        %v792 = vadd.f32 %v790, %v791
        %v793 = vrot.slane %v792, 1
        %v794 = vadd.f32 %v792, %v793
        %795 = vst [vmem:[%s266] sm:$0x1] %v794
        %s796 = sand.u32 %s114, 1
        %s797 = scalar_lea.sflag [#allocation5], %s796
        %s798 = sand.u32 %s114, 1
        %s799 = smul.addr %s798, 16
        %s800 = scalar_lea.vmem [#allocation6], %s799
        %s801 = sand.u32 %s24, 1
        %s802 = scalar_lea.sflag [#allocation8], %s801
        %s803 = sand.u32 %s142, 1
        %s804 = scalar_lea.vmem [#allocation7], %s803
        %s805 = sand.u32 %s24, 1
        %s806 = scalar_lea.sflag [#allocation8], %s805
        %s807 = sand.u32 %s170, 1
        %s808 = scalar_lea.vmem [#allocation9], %s807
        // Predicated region
        $region37: #{tpu_custom_call.1} parent=31 // pred_check
          %p809 = pneg %p124
        $region38: #{tpu_custom_call.1} parent=31 // pred_check_branch
          %811 = sbr.rel (%p809) target = $region40
        $region39: #{tpu_custom_call.1} parent=31 // pred_region
          %s812 = smul.u32 2, %s29
          %s814 = ssub.s32 256, 256
          %815 = vsyncadd %s797, %s814
          %s816 = smul.addr %s28, 2
          %s817 = sadd.s32 %s812, %s816
          %s818 = smul.addr %s817, 128
          %s819 = scalar_lea.hbm %s3, %s818
          %s820 = sshll.u32 %s800, 4
          %s821 = int_to_ptr.vmem [resolvable:$true] %s820
          %826 = dma.vmem_to_hbm [thread:$0]  %s821, 256, %s819, %s797, 128, 128, 8
        $region40: #{tpu_custom_call.1} parent=31 // pred_fallthru
          _
        // Predicated region
        $region41: #{tpu_custom_call.1} parent=31 // pred_check
          %p827 = pneg %p152
        $region42: #{tpu_custom_call.1} parent=31 // pred_check_branch
          %829 = sbr.rel (%p827) target = $region44
        $region43: #{tpu_custom_call.1} parent=31 // pred_region
          %s831 = ssub.s32 16, 16
          %832 = vsyncadd %s802, %s831
          %s833 = sadd.s32 %s29, %s28
          %s834 = smul.addr %s833, 16
          %s835 = scalar_lea.hbm %s4, %s834
          %s837 = sshll.u32 %s804, 4
          %s838 = int_to_ptr.vmem [resolvable:$true] %s837
          %840 = dma.vmem_to_hbm [thread:$0]  %s838, 16, %s835, %s802
        $region44: #{tpu_custom_call.1} parent=31 // pred_fallthru
          _
        // Predicated region
        $region45: #{tpu_custom_call.1} parent=31 // pred_check
          %p841 = pneg %p180
        $region46: #{tpu_custom_call.1} parent=31 // pred_check_branch
          %843 = sbr.rel (%p841) target = $region48
        $region47: #{tpu_custom_call.1} parent=31 // pred_region
          %s845 = ssub.s32 16, 16
          %846 = vsyncadd %s806, %s845
          %s847 = sadd.s32 %s29, %s28
          %s848 = smul.addr %s847, 16
          %s849 = scalar_lea.hbm %s5, %s848
          %s851 = sshll.u32 %s808, 4
          %s852 = int_to_ptr.vmem [resolvable:$true] %s851
          %854 = dma.vmem_to_hbm [thread:$0]  %s852, 16, %s849, %s806
        $region48: #{tpu_custom_call.1} parent=31 // pred_fallthru
          _
      $region32: #{tpu_custom_call.1} parent=5 // pred_fallthru
        _
      %p855 = scmp.le.s32.totalorder 2, %s19
      // Predicated region
      $region49: #{tpu_custom_call.1} parent=5 // pred_check
        %p856 = pneg %p855
      $region50: #{tpu_custom_call.1} parent=5 // pred_check_branch
        %858 = sbr.rel (%p856) target = $region52
      $region51: #{tpu_custom_call.1} parent=5 // pred_region
        %s859 = ssub.s32 %s19, 2
        // Predicated region
        $region53: #{tpu_custom_call.1} parent=51 // pred_check
          %p860 = pneg %p130
        $region54: #{tpu_custom_call.1} parent=51 // pred_check_branch
          %862 = sbr.rel (%p860) target = $region56
        $region55: #{tpu_custom_call.1} parent=51 // pred_region
          %s863 = sand.u32 %s115, 1
          %s864 = scalar_lea.sflag [#allocation5], %s863
          %s865 = sand.u32 %s115, 1
          %s866 = smul.addr %s865, 16
          %s867 = scalar_lea.vmem [#allocation6], %s866
          %868 = dma.done %s864, 256
        $region56: #{tpu_custom_call.1} parent=51 // pred_fallthru
          _
        // Predicated region
        $region57: #{tpu_custom_call.1} parent=51 // pred_check
          %p869 = pneg %p158
        $region58: #{tpu_custom_call.1} parent=51 // pred_check_branch
          %871 = sbr.rel (%p869) target = $region60
        $region59: #{tpu_custom_call.1} parent=51 // pred_region
          %s872 = sand.u32 %s25, 1
          %s873 = scalar_lea.sflag [#allocation8], %s872
          %s874 = sand.u32 %s143, 1
          %s875 = scalar_lea.vmem [#allocation7], %s874
          %876 = dma.done %s873, 16
        $region60: #{tpu_custom_call.1} parent=51 // pred_fallthru
          _
        // Predicated region
        $region61: #{tpu_custom_call.1} parent=51 // pred_check
          %p877 = pneg %p186
        $region62: #{tpu_custom_call.1} parent=51 // pred_check_branch
          %879 = sbr.rel (%p877) target = $region64
        $region63: #{tpu_custom_call.1} parent=51 // pred_region
          %s880 = sand.u32 %s25, 1
          %s881 = scalar_lea.sflag [#allocation8], %s880
          %s882 = sand.u32 %s171, 1
          %s883 = scalar_lea.vmem [#allocation9], %s882
          %884 = dma.done %s881, 16
        $region64: #{tpu_custom_call.1} parent=51 // pred_fallthru
          _
      $region52: #{tpu_custom_call.1} parent=5 // pred_fallthru
        _
    $region6: #{tpu_custom_call.1} parent=1 // loop_footer
      %s23 = sadd.s32 1, %s19
    $region7: #{tpu_custom_call.1} parent=1 // loop_footer_branch
      %18 = sbr.rel target = $region3
    $region8: #{tpu_custom_call.1} parent=1 // loop_exit
      _
    %885 = vsyncpa [#allocation4], 1
    %s886 = scalar_lea.sflag [#allocation4], 1
    %887 = vsyncpa %s886, 1
    %888 = vsyncpa [#allocation5], 1
    %s889 = scalar_lea.sflag [#allocation5], 1
    %890 = vsyncpa %s889, 1
    %891 = vsyncpa [#allocation8], 1
    %s892 = scalar_lea.sflag [#allocation8], 1
    %893 = vsyncpa %s892, 1

</llo_original>
